<compile_context>
chip_gen: v5e
topology: v5e:2x2
jax: 0.10.0
libtpu: 0.0.40
codegen_flags: <defaults>
</compile_context>

<pallas_src>
import functools
import math

import jax
import jax.numpy as jnp
from jax import lax
from jax.experimental import pallas as pl
from jax.experimental.pallas import tpu as pltpu

EPS = 1e-5          # nn.GroupNorm default eps
NUM_GROUPS = 8      # GroupNorm(8, nc)


# --------------------------------------------------------------------------- #
# Hardware-aware tiling / VMEM budget
# --------------------------------------------------------------------------- #
def _hw_config(C: int):
    """Returns (token_tile_cap, vmem_limit_bytes) for the local TPU generation."""
    try:
        kind = jax.devices()[0].device_kind.lower()
    except Exception:
        kind = ""
    if "v5 lite" in kind or "v5e" in kind or "v5lite" in kind:
        # 197 TF/s MXU: step overhead already negligible at 512; keep VMEM pressure low.
        return (512 if C < 1024 else 256), 64 * 1024 * 1024
    if "v7" in kind or "tpu7" in kind:
        # 2 TC/chip but only 64 MiB VMEM per TC: big tiles only while they fit.
        return (1024 if C <= 512 else 512), 48 * 1024 * 1024
    # v6e / default: 128 MiB VMEM, 918 TF/s MXU -> amortize the ~0.35us step overhead.
    return 1024, 96 * 1024 * 1024


def _pick_tile(Lp: int, cap: int) -> int:
    """Largest 128-multiple <= cap dividing Lp (Lp is already a multiple of 128)."""
    if Lp <= cap:
        return Lp
    t = cap - (cap % 128)
    while t >= 128:
        if Lp % t == 0:
            return t
        t -= 128
    return 128


# --------------------------------------------------------------------------- #
# Pre-pass: GroupNorm (folded affine) + fused K/V projection, once per token.
#   K is written token-major (B, L, C) so the attention scores matmul is NN.
# --------------------------------------------------------------------------- #
def _kv_prepass_kernel(C, x_ref, gnsb_ref, wkv_ref, kT_ref, v_ref):
    g = gnsb_ref[0]                                   # (2C, 1) f32
    gscale, gshift = g[:C], g[C:]
    xn = (x_ref[0].astype(jnp.float32) * gscale + gshift).astype(jnp.bfloat16)   # (C, t)
    kv = jnp.dot(wkv_ref[...], xn, preferred_element_type=jnp.float32)           # (2C, t)
    kT_ref[0] = kv[:C].T.astype(jnp.bfloat16)         # (t, C)  -- transpose once, off hot loop
    v_ref[0] = kv[C:].astype(jnp.bfloat16)            # (C, t)


# --------------------------------------------------------------------------- #
# Flash attention kernel: grid = (B, L/tq, L/tk), KV axis innermost ("arbitrary").
# --------------------------------------------------------------------------- #
def _attn_kernel(C, l_valid, tk, xq_ref, kT_ref, v_ref, gnsb_ref, wq_ref, bqo_ref,
                 wo_ref, o_ref, q_sc, m_sc, l_sc, acc_sc):
    ki = pl.program_id(2)
    nk = pl.num_programs(2)

    @pl.when(ki == 0)
    def _init():
        m_sc[...] = jnp.full(m_sc.shape, -jnp.inf, dtype=jnp.float32)
        l_sc[...] = jnp.zeros(l_sc.shape, dtype=jnp.float32)
        acc_sc[...] = jnp.zeros(acc_sc.shape, dtype=jnp.float32)
        # Project the Q tile once per (b, q-tile): block is resident across the KV axis.
        g = gnsb_ref[0]                                                  # (2C, 1)
        xnq = (xq_ref[0].astype(jnp.float32) * g[:C] + g[C:]).astype(jnp.bfloat16)
        q = jnp.dot(wq_ref[...], xnq,
                    preferred_element_type=jnp.float32) + bqo_ref[...][:C]   # 1/sqrt(C) folded
        q_sc[...] = q.astype(jnp.bfloat16)                               # (C, tq)

    # ---- scores (tk, tq): plain NN matmul, K already stored transposed (bf16) ----
    s = jnp.dot(kT_ref[0], q_sc[...], preferred_element_type=jnp.float32)

    if l_valid is not None:  # padded L: mask keys beyond the real sequence length
        key_pos = ki * tk + lax.broadcasted_iota(jnp.int32, s.shape, 0)
        s = jnp.where(key_pos < l_valid, s, jnp.float32(-1e30))

    # ---- online softmax over keys (sublane axis), f32 ----
    m_prev = m_sc[...]
    m_new = jnp.maximum(m_prev, jnp.max(s, axis=0, keepdims=True))
    alpha = jnp.exp(m_prev - m_new)
    p = jnp.exp(s - m_new)                                               # (tk, tq)
    l_sc[...] = alpha * l_sc[...] + jnp.sum(p, axis=0, keepdims=True)
    acc_sc[...] = alpha * acc_sc[...] + jnp.dot(
        v_ref[0], p.astype(jnp.bfloat16), preferred_element_type=jnp.float32)   # (C, tq)
    m_sc[...] = m_new

    @pl.when(ki == nk - 1)
    def _finalize():
        a = acc_sc[...] * pl.reciprocal(l_sc[...], approx=True)          # (C, tq)
        out = jnp.dot(wo_ref[...], a.astype(jnp.bfloat16),
                      preferred_element_type=jnp.float32) + bqo_ref[...][C:]   # bv folded in
        o_ref[0] = (xq_ref[0].astype(jnp.float32) + out).astype(o_ref.dtype)   # residual


# --------------------------------------------------------------------------- #
# Wrapper
# --------------------------------------------------------------------------- #
def attn2d_pallas(x_nchw, params, *, q_tile=None, kv_tile=None):
    """x_nchw: (B, C, H, W). Returns (B, C, H, W) = x + Attn(GroupNorm(x))."""
    B, C, H, W = x_nchw.shape
    assert C % NUM_GROUPS == 0, "GroupNorm(8, nc) requires nc % 8 == 0"
    L = H * W
    Lp = ((L + 127) // 128) * 128          # lane-dense token axis (pad, mask keys)
    gs = C // NUM_GROUPS
    scale = 1.0 / math.sqrt(C)             # single head -> head_dim == C

    x = x_nchw.reshape(B, C, L)            # NCHW-native token layout (no HBM transpose)

    # ---- GroupNorm statistics (cheap plain-JAX reduction over the UNpadded tokens) ----
    xg = x.astype(jnp.float32).reshape(B, NUM_GROUPS, gs * L)
    mean = jnp.mean(xg, axis=-1)                                     # (B, G)
    var = jnp.maximum(jnp.var(xg, axis=-1), 0.0)
    inv = lax.rsqrt(var + EPS)
    mean_c = jnp.repeat(mean, gs, axis=1)                            # (B, C)
    inv_c = jnp.repeat(inv, gs, axis=1)
    gamma = params["gn_gamma"].astype(jnp.float32)[None, :]
    beta = params["gn_beta"].astype(jnp.float32)[None, :]
    gn_scale = (inv_c * gamma)[:, :, None]                           # (B, C, 1)
    gn_shift = (beta - mean_c * inv_c * gamma)[:, :, None]           # (B, C, 1)
    gnsb = jnp.concatenate([gn_scale, gn_shift], axis=1)             # (B, 2C, 1) merged

    # ---- fold / fuse attention parameters on the host ----
    w_in = params["in_proj_w"].astype(jnp.float32)                   # (3C, C)
    b_in = params["in_proj_b"].astype(jnp.float32)                   # (3C,)
    w_out = params["out_proj_w"].astype(jnp.float32)                 # (C, C)
    b_out = params["out_proj_b"].astype(jnp.float32)                 # (C,)

    wq = (w_in[:C] * scale).astype(jnp.bfloat16)                     # 1/sqrt(C) folded in
    bq = (b_in[:C] * scale).reshape(C, 1)                            # f32
    wkv = w_in[C:].astype(jnp.bfloat16)                              # (2C, C); bk dropped
    wo = w_out.astype(jnp.bfloat16)                                  # (C, C)
    bo = (w_out @ b_in[2 * C:] + b_out).reshape(C, 1)                # bv folded through Wo
    bqo = jnp.concatenate([bq, bo], axis=0).astype(jnp.float32)      # (2C, 1) merged

    # ---- tiling (generation-aware) ----
    cap, vmem_limit = _hw_config(C)
    tq = _pick_tile(Lp, cap) if q_tile is None else q_tile
    tk = _pick_tile(Lp, cap) if kv_tile is None else kv_tile
    if q_tile is None and B * (Lp // tq) < 2 and Lp % 256 == 0:
        tq = Lp // 2                       # keep both TensorCores busy on 2-TC chips
    assert Lp % tq == 0 and Lp % tk == 0
    assert (tq == Lp or tq % 128 == 0) and (tk == Lp or tk % 128 == 0)
    tp = _pick_tile(Lp, cap)               # pre-pass token tile

    x_p = x if Lp == L else jnp.pad(x, ((0, 0), (0, 0), (0, Lp - L)))
    l_valid = None if Lp == L else L

    cparams = pltpu.CompilerParams(
        dimension_semantics=("parallel", "parallel"),
        vmem_limit_bytes=vmem_limit)

    # ---- pre-pass: write bf16 K (token-major) and V once ----
    kT, v = pl.pallas_call(
        functools.partial(_kv_prepass_kernel, C),
        out_shape=(jax.ShapeDtypeStruct((B, Lp, C), jnp.bfloat16),
                   jax.ShapeDtypeStruct((B, C, Lp), jnp.bfloat16)),
        grid_spec=pltpu.PrefetchScalarGridSpec(
            num_scalar_prefetch=0,
            grid=(B, Lp // tp),
            in_specs=[
                pl.BlockSpec((1, C, tp), lambda b, t: (b, 0, t)),        # x
                pl.BlockSpec((1, 2 * C, 1), lambda b, t: (b, 0, 0)),     # GN scale|shift
                pl.BlockSpec((2 * C, C), lambda b, t: (0, 0)),           # W_kv (bf16)
            ],
            out_specs=(
                pl.BlockSpec((1, tp, C), lambda b, t: (b, t, 0)),        # K^T (bf16)
                pl.BlockSpec((1, C, tp), lambda b, t: (b, 0, t)),        # V   (bf16)
            )),
        compiler_params=cparams,
    )(x_p, gnsb, wkv)

    # ---- flash attention + output projection + residual ----
    grid = (B, Lp // tq, Lp // tk)
    out = pl.pallas_call(
        functools.partial(_attn_kernel, C, l_valid, tk),
        out_shape=jax.ShapeDtypeStruct((B, C, Lp), x_nchw.dtype),
        grid_spec=pltpu.PrefetchScalarGridSpec(
            num_scalar_prefetch=0,
            grid=grid,
            in_specs=[
                pl.BlockSpec((1, C, tq), lambda b, qi, ki: (b, 0, qi)),  # x (Q side + residual)
                pl.BlockSpec((1, tk, C), lambda b, qi, ki: (b, ki, 0)),  # K^T tile (bf16)
                pl.BlockSpec((1, C, tk), lambda b, qi, ki: (b, 0, ki)),  # V tile (bf16)
                pl.BlockSpec((1, 2 * C, 1), lambda b, qi, ki: (b, 0, 0)),  # GN scale|shift
                pl.BlockSpec((C, C), lambda b, qi, ki: (0, 0)),          # Wq (scaled, bf16)
                pl.BlockSpec((2 * C, 1), lambda b, qi, ki: (0, 0)),      # bq | bo' (f32)
                pl.BlockSpec((C, C), lambda b, qi, ki: (0, 0)),          # Wo (bf16)
            ],
            out_specs=pl.BlockSpec((1, C, tq), lambda b, qi, ki: (b, 0, qi)),
            scratch_shapes=[
                pltpu.VMEM((C, tq), jnp.bfloat16),    # cached projected Q tile
                pltpu.VMEM((1, tq), jnp.float32),     # running max  m
                pltpu.VMEM((1, tq), jnp.float32),     # running sum  l
                pltpu.VMEM((C, tq), jnp.float32),     # output accumulator
            ]),
        compiler_params=pltpu.CompilerParams(
            dimension_semantics=("parallel", "parallel", "arbitrary"),
            vmem_limit_bytes=vmem_limit),
    )(x_p, kT, v, gnsb, wq, bqo, wo)

    if Lp != L:
        out = out[:, :, :L]
    return out.reshape(B, C, H, W)


# --------------------------------------------------------------------------- #
# Pure-JAX f32 reference of the PyTorch forward (for verification)
# --------------------------------------------------------------------------- #
def attn2d_reference(x, params):
    B, C, H, W = x.shape
    L = H * W
    gs = C // NUM_GROUPS
    h = x.reshape(B, C, L)
    hg = h.reshape(B, NUM_GROUPS, gs * L)
    mean = hg.mean(axis=-1, keepdims=True)
    var = hg.var(axis=-1, keepdims=True)
    hn = ((hg - mean) / jnp.sqrt(var + EPS)).reshape(B, C, L)
    hn = hn * params["gn_gamma"][None, :, None] + params["gn_beta"][None, :, None]
    hn = jnp.transpose(hn, (2, 0, 1))                                   # (L, B, C)
    wq = params["in_proj_w"][:C]
    wk = params["in_proj_w"][C:2 * C]
    wv = params["in_proj_w"][2 * C:]
    bq, bk, bv = (params["in_proj_b"][:C], params["in_proj_b"][C:2 * C],
                  params["in_proj_b"][2 * C:])
    q = jnp.einsum("lbc,dc->lbd", hn, wq) + bq
    k = jnp.einsum("lbc,dc->lbd", hn, wk) + bk
    v = jnp.einsum("lbc,dc->lbd", hn, wv) + bv
    scores = jnp.einsum("qbd,kbd->bqk", q * (C ** -0.5), k)
    attn = jax.nn.softmax(scores, axis=-1)
    a = jnp.einsum("bqk,kbd->qbd", attn, v)
    out = jnp.einsum("qbd,ed->qbe", a, params["out_proj_w"]) + params["out_proj_b"]
    out = jnp.transpose(out, (1, 2, 0)).reshape(B, C, H, W)
    return x + out


if __name__ == "__main__":
    key = jax.random.PRNGKey(0)
    B, C, H, W = 2, 16, 16, 16              # nc divisible by 8; L = 256 tokens
    ks = jax.random.split(key, 8)

    x = jax.random.normal(ks[0], (B, C, H, W), dtype=jnp.float32)
    params = {
        "gn_gamma": 1.0 + 0.1 * jax.random.normal(ks[1], (C,), dtype=jnp.float32),
        "gn_beta": 0.1 * jax.random.normal(ks[2], (C,), dtype=jnp.float32),
        "in_proj_w": (C ** -0.5) * jax.random.normal(ks[3], (3 * C, C), dtype=jnp.float32),
        "in_proj_b": 0.1 * jax.random.normal(ks[4], (3 * C,), dtype=jnp.float32),
        "out_proj_w": (C ** -0.5) * jax.random.normal(ks[5], (C, C), dtype=jnp.float32),
        "out_proj_b": 0.1 * jax.random.normal(ks[6], (C,), dtype=jnp.float32),
    }

    ref = attn2d_reference(x, params)

    # Default tiling (single KV tile at this size).
    out = jax.block_until_ready(attn2d_pallas(x, params))
    assert out.shape == (B, C, H, W)
    assert jnp.allclose(out, ref, atol=5e-2, rtol=5e-2), "mismatch (default tiles)"

    # Explicit 128x128 tiles: grid (B, 2, 2) exercises the multi-tile online-softmax path.
    out_t = jax.block_until_ready(attn2d_pallas(x, params, q_tile=128, kv_tile=128))
    assert jnp.allclose(out_t, ref, atol=5e-2, rtol=5e-2), "mismatch (flash tiles)"

    # Non-128-multiple spatial size (14x14 -> L=196): exercises lane-padding + key masking.
    x2 = jax.random.normal(ks[7], (1, C, 14, 14), dtype=jnp.float32)
    ref2 = attn2d_reference(x2, params)
    out2 = jax.block_until_ready(attn2d_pallas(x2, params))
    assert out2.shape == x2.shape
    assert jnp.allclose(out2, ref2, atol=5e-2, rtol=5e-2), "mismatch (padded L)"

    print("KERNEL_OK")
</pallas_src>

<mosaic_0001>
module attributes {stable_mosaic.version = 11 : i64} {
  func.func @_kv_prepass_kernel(%arg0: i32, %arg1: i32, %arg2: memref<1x16x256xf32, #tpu.memory_space<vmem>>, %arg3: memref<1x32x1xf32, #tpu.memory_space<vmem>>, %arg4: memref<32x16xbf16, #tpu.memory_space<vmem>>, %arg5: memref<1x256x16xbf16, #tpu.memory_space<vmem>>, %arg6: memref<1x16x256xbf16, #tpu.memory_space<vmem>>) attributes {dimension_semantics = [#tpu.dimension_semantics<parallel>, #tpu.dimension_semantics<parallel>], iteration_bounds = array<i64: 2, 1>, scalar_prefetch = 0 : i64, scratch_operands = 0 : i64, tpu.core_type = #tpu.core_type<tc>, window_params = [{transform_indices = @transform_0, window_bounds = array<i64: 1, 16, 256>}, {transform_indices = @transform_1, window_bounds = array<i64: 1, 32, 1>}, {pipeline_mode = #tpu.pipeline_mode<synchronous>, transform_indices = @transform_2, window_bounds = array<i64: 32, 16>}, {transform_indices = @transform_3, window_bounds = array<i64: 1, 256, 16>}, {transform_indices = @transform_4, window_bounds = array<i64: 1, 16, 256>}]} {
    %c0 = arith.constant 0 : index
    %c0_0 = arith.constant 0 : index
    %c0_1 = arith.constant 0 : index
    %0 = vector.load %arg3[%c0, %c0_0, %c0_1] : memref<1x32x1xf32, #tpu.memory_space<vmem>>, vector<1x32x1xf32>
    %1 = vector.shape_cast %0 : vector<1x32x1xf32> to vector<32x1xf32>
    %2 = vector.extract_strided_slice %1 {offsets = [0, 0], sizes = [16, 1], strides = [1, 1]} : vector<32x1xf32> to vector<16x1xf32>
    %3 = vector.extract_strided_slice %1 {offsets = [16, 0], sizes = [16, 1], strides = [1, 1]} : vector<32x1xf32> to vector<16x1xf32>
    %c0_2 = arith.constant 0 : index
    %c0_3 = arith.constant 0 : index
    %c0_4 = arith.constant 0 : index
    %4 = vector.load %arg2[%c0_2, %c0_3, %c0_4] : memref<1x16x256xf32, #tpu.memory_space<vmem>>, vector<1x16x256xf32>
    %5 = vector.shape_cast %4 : vector<1x16x256xf32> to vector<16x256xf32>
    %6 = vector.broadcast %2 : vector<16x1xf32> to vector<16x256xf32>
    %7 = arith.mulf %5, %6 : vector<16x256xf32>
    %8 = vector.broadcast %3 : vector<16x1xf32> to vector<16x256xf32>
    %9 = arith.addf %7, %8 : vector<16x256xf32>
    %10 = arith.truncf %9 : vector<16x256xf32> to vector<16x256xbf16>
    %c0_5 = arith.constant 0 : index
    %c0_6 = arith.constant 0 : index
    %11 = vector.load %arg4[%c0_5, %c0_6] : memref<32x16xbf16, #tpu.memory_space<vmem>>, vector<32x16xbf16>
    %cst = arith.constant dense<0.000000e+00> : vector<32x256xf32>
    %12 = tpu.matmul %11, %10, %cst {dimension_numbers = #tpu.dot_dimension_numbers<[1], [0], [0], [1], [0, 0, 1, 1], [], []>} : vector<32x16xbf16>, vector<16x256xbf16>, vector<32x256xf32> -> vector<32x256xf32>
    %13 = vector.extract_strided_slice %12 {offsets = [0, 0], sizes = [16, 256], strides = [1, 1]} : vector<32x256xf32> to vector<16x256xf32>
    %14 = tpu.transpose %13, [1, 0] : vector<16x256xf32> -> vector<256x16xf32>
    %15 = arith.truncf %14 : vector<256x16xf32> to vector<256x16xbf16>
    %c0_7 = arith.constant 0 : index
    %c0_8 = arith.constant 0 : index
    %c0_9 = arith.constant 0 : index
    %16 = vector.load %arg5[%c0_7, %c0_8, %c0_9] : memref<1x256x16xbf16, #tpu.memory_space<vmem>>, vector<1x256x16xbf16>
    %17 = vector.shape_cast %16 : vector<1x256x16xbf16> to vector<256x16xbf16>
    %18 = vector.shape_cast %15 : vector<256x16xbf16> to vector<1x256x16xbf16>
    tpu.vector_store %arg5[%c0_7, %c0_8, %c0_9], %18 {strides = array<i32>} : memref<1x256x16xbf16, #tpu.memory_space<vmem>>, vector<1x256x16xbf16>,
    %19 = vector.extract_strided_slice %12 {offsets = [16, 0], sizes = [16, 256], strides = [1, 1]} : vector<32x256xf32> to vector<16x256xf32>
    %20 = arith.truncf %19 : vector<16x256xf32> to vector<16x256xbf16>
    %c0_10 = arith.constant 0 : index
    %c0_11 = arith.constant 0 : index
    %c0_12 = arith.constant 0 : index
    %21 = vector.load %arg6[%c0_10, %c0_11, %c0_12] : memref<1x16x256xbf16, #tpu.memory_space<vmem>>, vector<1x16x256xbf16>
    %22 = vector.shape_cast %21 : vector<1x16x256xbf16> to vector<16x256xbf16>
    %23 = vector.shape_cast %20 : vector<16x256xbf16> to vector<1x16x256xbf16>
    tpu.vector_store %arg6[%c0_10, %c0_11, %c0_12], %23 {strides = array<i32>} : memref<1x16x256xbf16, #tpu.memory_space<vmem>>, vector<1x16x256xbf16>,
    return
  }
  func.func @transform_0(%arg0: i32, %arg1: i32) -> (i32, i32, i32) {
    %c0_i32 = arith.constant 0 : i32
    %c0_i32_0 = arith.constant 0 : i32
    return %arg0, %c0_i32, %arg1 : i32, i32, i32
  }
  func.func @transform_1(%arg0: i32, %arg1: i32) -> (i32, i32, i32) {
    %c0_i32 = arith.constant 0 : i32
    %c0_i32_0 = arith.constant 0 : i32
    %c0_i32_1 = arith.constant 0 : i32
    return %arg0, %c0_i32, %c0_i32_0 : i32, i32, i32
  }
  func.func @transform_2(%arg0: i32, %arg1: i32) -> (i32, i32) {
    %c0_i32 = arith.constant 0 : i32
    %c0_i32_0 = arith.constant 0 : i32
    %c0_i32_1 = arith.constant 0 : i32
    return %c0_i32, %c0_i32_0 : i32, i32
  }
  func.func @transform_3(%arg0: i32, %arg1: i32) -> (i32, i32, i32) {
    %c0_i32 = arith.constant 0 : i32
    %c0_i32_0 = arith.constant 0 : i32
    return %arg0, %arg1, %c0_i32 : i32, i32, i32
  }
  func.func @transform_4(%arg0: i32, %arg1: i32) -> (i32, i32, i32) {
    %c0_i32 = arith.constant 0 : i32
    %c0_i32_0 = arith.constant 0 : i32
    return %arg0, %c0_i32, %arg1 : i32, i32, i32
  }
}

</mosaic_0001>

<llo_original>
// kernel: tpu_custom_call.1
$region0: #{tpu_custom_call.1}
  #allocation0 [shape = 'u32[]', space=smem, size = 0x4, offset = 0x4, fixed_abs, tag = 'smem constant byte address 0x4 - core index']
  #allocation1 [shape = 'u32[72,128]{1,0:T(1,128)}', space=vmem, size = 0x9000, scoped, tag = 'internal scratch']
  %s0 = inlined_call_operand.vmem [shape: f32[2,16,256], index: 0, kind: input, shape index: {}]
  %s1 = inlined_call_operand.vmem [shape: f32[2,32,1], index: 1, kind: input, shape index: {}]
  %s2 = inlined_call_operand.vmem [shape: bf16[32,16], index: 2, kind: input, shape index: {}]
  %s3 = inlined_call_operand.vmem [shape: bf16[2,256,16], index: 3, kind: output, shape index: {0}]
  %s4 = inlined_call_operand.hbm [shape: bf16[2,16,256], index: 4, kind: output, shape index: {1}]
  %5 = xla_tuple %s3, %s4
  %s6 = sld [smem:[#allocation0]]
  $region53: #{tpu_custom_call.1} parent=0
    _
  %s8 = ssub.s32 1, %s6
  %s9 = scalar_select 0, %s8, %s6
  $region1: #{tpu_custom_call.1} parent=0
    #allocation2 [shape = 'u8[16384]{0}', space=vmem, size = 0x4000, scoped, tag = 'output window, operand 1']
    #allocation3 [shape = 's32[2]{0}', space=sflag, size = 0x8, scoped, tag = 'scoped memory for tpu_custom_call.1']
    %10 = vsyncpa [#allocation3], 0
    %s11 = scalar_lea.sflag [#allocation3], 1
    %12 = vsyncpa %s11, 0
    loop: start=0, step=1, limit=4
    $region2: #{tpu_custom_call.1} parent=1 // loop_pre_header
      _
    $region3: #{tpu_custom_call.1} parent=1 // loop_header
      %s14 = sphi 0, %s18
      %p15 = scmp.ge.s32.totalorder %s14, 4
      %s21 = sphi 0, %s33
      %s22 = sphi 0, %s29
      %s23 = sphi 0, %s21
      %s24 = sphi 0, %s22
      %s25 = sphi 0, %s23
      %s26 = sphi 0, %s24
      %s38 = sphi 0, %s40
      %s41 = sphi 0, %s38
      %s42 = sphi 0, %s41
      %s58 = sphi 0, %s42
      %s64 = sphi 0, %s66
      %s67 = sphi 0, %s64
      %s68 = sphi 0, %s67
      %s84 = sphi 0, %s68
      %s88 = sphi 0, %s88
      %s90 = sphi 0, %s88
      %s91 = sphi 0, %s90
      %s105 = sphi 0, %s91
      %s113 = sphi 0, %s115
      %s116 = sphi 0, %s113
      %s117 = sphi 0, %s116
      %s133 = sphi 0, %s117
      %s141 = sphi 0, %s143
      %s144 = sphi 0, %s141
      %s145 = sphi 0, %s144
      %s161 = sphi 0, %s145
    $region4: #{tpu_custom_call.1} parent=1 // loop_header_branch
      %17 = sbr.rel (%p15) target = $region8
    $region5: #{tpu_custom_call.1} parent=1 // loop_body
      %s19 = ssub.s32 %s14, 1
      %s20 = ssub.s32 %s14, 2
      %s27 = sadd.s32 1, %s22
      %p28 = scmp.ge.s32.totalorder %s27, 1
      %s29 = scalar_select %p28, 0, %s27
      %s30 = sadd.s32 1, %s21
      %s31 = scalar_select %p28, %s30, %s21
      %p32 = scmp.ge.s32.totalorder %s31, 2
      %s33 = scalar_select %p32, 0, %s31
      %s34 = ssub.s32 %s21, %s33
      %s35 = ssub.s32 %s22, %s29
      %s36 = sor.u32 %s34, %s35
      %p37 = scmp.eq.s32.totalorder %s36, 0
      %s39 = sadd.s32 %s38, 1
      %s40 = scalar_select %p37, %s38, %s39
      %p43 = pneg %p37
      %p44 = scmp.eq.s32.totalorder %s14, 1
      %p45 = por %p43, %p44
      %p46 = scmp.ne.s32.totalorder %s38, %s41
      %p47 = scmp.eq.s32.totalorder %s14, 0
      %p48 = por %p46, %p47
      %p49 = scmp.ne.s32.totalorder %s38, %s41
      %p50 = scmp.eq.s32.totalorder %s19, 1
      %p51 = por %p49, %p50
      %p52 = scmp.ne.s32.totalorder %s41, %s42
      %p53 = scmp.eq.s32.totalorder %s19, 0
      %p54 = por %p52, %p53
      %p55 = scmp.ne.s32.totalorder %s41, %s42
      %p56 = scmp.eq.s32.totalorder %s20, 1
      %p57 = por %p55, %p56
      %p59 = scmp.ne.s32.totalorder %s42, %s58
      %p60 = scmp.eq.s32.totalorder %s20, 0
      %p61 = por %p59, %p60
      %s62 = ssub.s32 %s21, %s33
      %p63 = scmp.eq.s32.totalorder %s62, 0
      %s65 = sadd.s32 %s64, 1
      %s66 = scalar_select %p63, %s64, %s65
      %p69 = pneg %p63
      %p70 = scmp.eq.s32.totalorder %s14, 1
      %p71 = por %p69, %p70
      %p72 = scmp.ne.s32.totalorder %s64, %s67
      %p73 = scmp.eq.s32.totalorder %s14, 0
      %p74 = por %p72, %p73
      %p75 = scmp.ne.s32.totalorder %s64, %s67
      %p76 = scmp.eq.s32.totalorder %s19, 1
      %p77 = por %p75, %p76
      %p78 = scmp.ne.s32.totalorder %s67, %s68
      %p79 = scmp.eq.s32.totalorder %s19, 0
      %p80 = por %p78, %p79
      %p81 = scmp.ne.s32.totalorder %s67, %s68
      %p82 = scmp.eq.s32.totalorder %s20, 1
      %p83 = por %p81, %p82
      %p85 = scmp.ne.s32.totalorder %s68, %s84
      %p86 = scmp.eq.s32.totalorder %s20, 0
      %p87 = por %p85, %p86
      %s89 = sadd.s32 %s88, 1
      %p92 = scmp.eq.s32.totalorder %s14, 1
      %p93 = scmp.ne.s32.totalorder %s88, %s90
      %p94 = scmp.eq.s32.totalorder %s14, 0
      %p95 = por %p93, %p94
      %p96 = scmp.ne.s32.totalorder %s88, %s90
      %p97 = scmp.eq.s32.totalorder %s19, 1
      %p98 = por %p96, %p97
      %p99 = scmp.ne.s32.totalorder %s90, %s91
      %p100 = scmp.eq.s32.totalorder %s19, 0
      %p101 = por %p99, %p100
      %p102 = scmp.ne.s32.totalorder %s90, %s91
      %p103 = scmp.eq.s32.totalorder %s20, 1
      %p104 = por %p102, %p103
      %p106 = scmp.ne.s32.totalorder %s91, %s105
      %p107 = scmp.eq.s32.totalorder %s20, 0
      %p108 = por %p106, %p107
      %s109 = ssub.s32 %s21, %s33
      %s110 = ssub.s32 %s22, %s29
      %s111 = sor.u32 %s109, %s110
      %p112 = scmp.eq.s32.totalorder %s111, 0
      %s114 = sadd.s32 %s113, 1
      %s115 = scalar_select %p112, %s113, %s114
      %p118 = pneg %p112
      %p119 = scmp.eq.s32.totalorder %s14, 1
      %p120 = por %p118, %p119
      %p121 = scmp.ne.s32.totalorder %s113, %s116
      %p122 = scmp.eq.s32.totalorder %s14, 0
      %p123 = por %p121, %p122
      %p124 = scmp.ne.s32.totalorder %s113, %s116
      %p125 = scmp.eq.s32.totalorder %s19, 1
      %p126 = por %p124, %p125
      %p127 = scmp.ne.s32.totalorder %s116, %s117
      %p128 = scmp.eq.s32.totalorder %s19, 0
      %p129 = por %p127, %p128
      %p130 = scmp.ne.s32.totalorder %s116, %s117
      %p131 = scmp.eq.s32.totalorder %s20, 1
      %p132 = por %p130, %p131
      %p134 = scmp.ne.s32.totalorder %s117, %s133
      %p135 = scmp.eq.s32.totalorder %s20, 0
      %p136 = por %p134, %p135
      %s137 = ssub.s32 %s21, %s33
      %s138 = ssub.s32 %s22, %s29
      %s139 = sor.u32 %s137, %s138
      %p140 = scmp.eq.s32.totalorder %s139, 0
      %s142 = sadd.s32 %s141, 1
      %s143 = scalar_select %p140, %s141, %s142
      %p146 = pneg %p140
      %p147 = scmp.eq.s32.totalorder %s14, 1
      %p148 = por %p146, %p147
      %p149 = scmp.ne.s32.totalorder %s141, %s144
      %p150 = scmp.eq.s32.totalorder %s14, 0
      %p151 = por %p149, %p150
      %p152 = scmp.ne.s32.totalorder %s141, %s144
      %p153 = scmp.eq.s32.totalorder %s19, 1
      %p154 = por %p152, %p153
      %p155 = scmp.ne.s32.totalorder %s144, %s145
      %p156 = scmp.eq.s32.totalorder %s19, 0
      %p157 = por %p155, %p156
      %p158 = scmp.ne.s32.totalorder %s144, %s145
      %p159 = scmp.eq.s32.totalorder %s20, 1
      %p160 = por %p158, %p159
      %p162 = scmp.ne.s32.totalorder %s145, %s161
      %p163 = scmp.eq.s32.totalorder %s20, 0
      %p164 = por %p162, %p163
      %p165 = scmp.le.s32.totalorder 1, %s14
      %p166 = scmp.lt.s32.totalorder %s14, 3
      %p167 = pnand %p165, %p166
      %p168 = pneg %p167
      // Predicated region
      $region9: #{tpu_custom_call.1} parent=5 // pred_check
        _
      $region10: #{tpu_custom_call.1} parent=5 // pred_check_branch
        %170 = sbr.rel (%p167) target = $region12
      $region11: #{tpu_custom_call.1} parent=5 // pred_region
        %s171 = ssub.s32 %s14, 1
        // Predicated region
        $region13: #{tpu_custom_call.1} parent=11 // pred_check
          %p172 = pneg %p101
        $region14: #{tpu_custom_call.1} parent=11 // pred_check_branch
          %174 = sbr.rel (%p172) target = $region16
        $region15: #{tpu_custom_call.1} parent=11 // pred_region
          _
        $region16: #{tpu_custom_call.1} parent=11 // pred_fallthru
          _
      $region12: #{tpu_custom_call.1} parent=5 // pred_fallthru
        _
      %p175 = scmp.lt.s32.totalorder %s14, 2
      // Predicated region
      $region17: #{tpu_custom_call.1} parent=5 // pred_check
        %p176 = pneg %p175
      $region18: #{tpu_custom_call.1} parent=5 // pred_check_branch
        %178 = sbr.rel (%p176) target = $region20
      $region19: #{tpu_custom_call.1} parent=5 // pred_region
        // Predicated region
        $region21: #{tpu_custom_call.1} parent=19 // pred_check
          %p179 = pneg %p48
        $region22: #{tpu_custom_call.1} parent=19 // pred_check_branch
          %181 = sbr.rel (%p179) target = $region24
        $region23: #{tpu_custom_call.1} parent=19 // pred_region
          %s182 = smul.u32 2, %s22
          %p183 = scmp.lt.s32.totalorder %s21, 1
          %s184 = scalar_select %p183, %s21, 1
          %p185 = scmp.lt.s32.totalorder %s182, 1
          %s186 = scalar_select %p185, %s182, 1
          %s187 = smul.addr %s184, 4
          %s188 = sadd.s32 %s186, %s187
          %s189 = smul.addr %s188, 8
          %s190 = scalar_lea.vmem %s0, %s189
          %s191 = smul.u32 2, %s22
        $region24: #{tpu_custom_call.1} parent=19 // pred_fallthru
          _
        // Predicated region
        $region25: #{tpu_custom_call.1} parent=19 // pred_check
          %p192 = pneg %p74
        $region26: #{tpu_custom_call.1} parent=19 // pred_check_branch
          %194 = sbr.rel (%p192) target = $region28
        $region27: #{tpu_custom_call.1} parent=19 // pred_region
          %p195 = scmp.lt.s32.totalorder %s21, 1
          %s196 = scalar_select %p195, %s21, 1
          %s197 = smul.addr %s196, 4
          %s198 = smul.addr %s197, 8
          %s199 = scalar_lea.vmem %s1, %s198
        $region28: #{tpu_custom_call.1} parent=19 // pred_fallthru
          _
      $region20: #{tpu_custom_call.1} parent=5 // pred_fallthru
        _
      %p200 = scmp.le.s32.totalorder 1, %s14
      %p201 = scmp.lt.s32.totalorder %s14, 3
      %p202 = pnand %p200, %p201
      %p203 = pneg %p202
      // Predicated region
      $region29: #{tpu_custom_call.1} parent=5 // pred_check
        _
      $region30: #{tpu_custom_call.1} parent=5 // pred_check_branch
        %205 = sbr.rel (%p202) target = $region32
      $region31: #{tpu_custom_call.1} parent=5 // pred_region
        %s206 = ssub.s32 %s14, 1
        %s207 = smul.u32 2, %s24
        %p208 = scmp.lt.s32.totalorder %s23, 1
        %s209 = scalar_select %p208, %s23, 1
        %p210 = scmp.lt.s32.totalorder %s207, 1
        %s211 = scalar_select %p210, %s207, 1
        %s212 = smul.addr %s209, 4
        %s213 = sadd.s32 %s211, %s212
        %s214 = smul.addr %s213, 8
        %s215 = scalar_lea.vmem %s0, %s214
        %p216 = pneg %p54
        %p217 = pneg %p51
        %p218 = scmp.lt.s32.totalorder %s23, 1
        %s219 = scalar_select %p218, %s23, 1
        %s220 = smul.addr %s219, 4
        %s221 = smul.addr %s220, 8
        %s222 = scalar_lea.vmem %s1, %s221
        %p223 = pneg %p80
        %p224 = pneg %p77
        %p225 = pneg %p101
        %p226 = pneg %p98
        %p227 = pneg %p129
        %p228 = pneg %p126
        %s229 = smul.u32 32, %s24
        %p230 = scmp.lt.s32.totalorder %s23, 1
        %s231 = scalar_select %p230, %s23, 1
        %p232 = scmp.lt.s32.totalorder %s229, 31
        %s233 = scalar_select %p232, %s229, 31
        %s234 = smul.addr %s231, 32
        %s235 = sadd.s32 %s233, %s234
        %s236 = smul.addr %s235, 4
        %s237 = scalar_lea.vmem %s3, %s236
        %p238 = pneg %p157
        %p239 = pneg %p154
        %s240 = sand.u32 %s144, 1
        %s241 = scalar_lea.sflag [#allocation3], %s240
        %s242 = sand.u32 %s144, 1
        %s243 = smul.addr %s242, 16
        %s244 = scalar_lea.vmem [#allocation2], %s243
        %s245 = smul.u32 2, %s24
        %p246 = scmp.lt.s32.totalorder %s23, 1
        %s247 = scalar_select %p246, %s23, 1
        %p248 = scmp.lt.s32.totalorder %s245, 1
        %s249 = scalar_select %p248, %s245, 1
        %s250 = smul.addr %s247, 4
        %s251 = sadd.s32 %s249, %s250
        %s252 = smul.addr %s251, 8
        %s253 = scalar_lea.vmem %s0, %s252
        %s254 = smul.u32 2, %s24
        %p255 = scmp.lt.s32.totalorder %s23, 1
        %s256 = scalar_select %p255, %s23, 1
        %s257 = smul.addr %s256, 4
        %s258 = smul.addr %s257, 8
        %s259 = scalar_lea.vmem %s1, %s258
        %s260 = smul.u32 32, %s24
        %p261 = scmp.lt.s32.totalorder %s23, 1
        %s262 = scalar_select %p261, %s23, 1
        %p263 = scmp.lt.s32.totalorder %s260, 31
        %s264 = scalar_select %p263, %s260, 31
        %s265 = smul.addr %s262, 32
        %s266 = sadd.s32 %s264, %s265
        %s267 = smul.addr %s266, 4
        %s268 = scalar_lea.vmem %s3, %s267
        %s269 = smul.u32 32, %s24
        %s270 = smul.u32 2, %s24
        %v272 = vld [vmem:[%s259] sm:$0xff]
        %v273 = vld [vmem:[%s259 + $0x8] sm:$0xff]
        %v274 = vld [vmem:[%s259 + $0x10] sm:$0xff]
        %v275 = vld [vmem:[%s259 + $0x18] sm:$0xff]
        %v276 = vld [vmem:[%s253] sm:$0xff]
        %v277 = vld [vmem:[%s253 + $0x8] sm:$0xff]
        %v278 = vld [vmem:[%s253 + $0x10] sm:$0xff]
        %v279 = vld [vmem:[%s253 + $0x18] sm:$0xff]
        %281 = vset.pattern.permute.xlu0 0
        %282 = vperm.xlu0 %281, %v272
        %v283 = vpop.permute.xlu0 %282
        %286 = vset.pattern.permute.xlu0 0
        %287 = vperm.xlu0 %286, %v273
        %v288 = vpop.permute.xlu0 %287
        %v290 = vmul.f32 %v276, %v283
        %v291 = vmul.f32 %v277, %v283
        %v292 = vmul.f32 %v278, %v288
        %v293 = vmul.f32 %v279, %v288
        %295 = vset.pattern.permute.xlu0 0
        %296 = vperm.xlu0 %295, %v274
        %v297 = vpop.permute.xlu0 %296
        %300 = vset.pattern.permute.xlu0 0
        %301 = vperm.xlu0 %300, %v275
        %v302 = vpop.permute.xlu0 %301
        %v304 = vadd.f32 %v290, %v297
        %v305 = vadd.f32 %v291, %v297
        %v306 = vadd.f32 %v292, %v302
        %v307 = vadd.f32 %v293, %v302
        %v308 = vpack.c.bf16 %v306, %v304
        %v309 = vpack.c.bf16 %v307, %v305
        %v310 = vld [vmem:[%s2] sm:$0xf]
        %v311 = vld [vmem:[%s2 + $0x4] sm:$0xf]
        %v312 = vld [vmem:[%s2 + $0x8] sm:$0xf]
        %v313 = vld [vmem:[%s2 + $0xc] sm:$0xf]
        %v318 = vunpack.c.l.b16 %v310
        %v319 = vunpack.c.l.b16 %v311
        %v320 = vunpack.c.l.b16 %v312
        %v321 = vunpack.c.l.b16 %v313
        %v322 = vpack.c.b16 %v319, %v318
        %v323 = vpack.c.b16 %v321, %v320
        %vm324 = vcmask 130048
        %v326 = vsel %vm324, %v322, 0
        %v329 = vsel %vm324, %v323, 0
        %331 = vmatpush.bf16.msra.mxu0 0
        %332 = vmatpush.bf16.msra.mxu0 0
        %333 = vmatpush.bf16.msra.mxu0 0
        %334 = vmatpush.bf16.msra.mxu0 0
        %335 = vmatpush.bf16.msra.mxu0 0
        %336 = vmatpush.bf16.msra.mxu0 0
        %337 = vmatpush.bf16.msra.mxu0 0
        %338 = vmatpush.bf16.msra.mxu0 %v308
        %339 = vmatmul.bf16.gmra.mxu0 %v326
        %v340 = vpop.f32.mrf.mxu0
        %v341 = vadd.f32 0.0, %v340
        %v342 = vpop.f32.mrf.mxu0
        %v343 = vadd.f32 0.0, %v342
        %344 = vmatmul.bf16.gmra.mxu0 %v329
        %v345 = vpop.f32.mrf.mxu0
        %v346 = vadd.f32 0.0, %v345
        %v347 = vpop.f32.mrf.mxu0
        %v348 = vadd.f32 0.0, %v347
        %349 = vdwg.mxu0
        %350 = vmatpush.bf16.msra.mxu0 0
        %351 = vmatpush.bf16.msra.mxu0 0
        %352 = vmatpush.bf16.msra.mxu0 0
        %353 = vmatpush.bf16.msra.mxu0 0
        %354 = vmatpush.bf16.msra.mxu0 0
        %355 = vmatpush.bf16.msra.mxu0 0
        %356 = vmatpush.bf16.msra.mxu0 0
        %357 = vmatpush.bf16.msra.mxu0 %v309
        %358 = vmatmul.bf16.gmra.mxu0 %v326
        %v359 = vpop.f32.mrf.mxu0
        %v360 = vadd.f32 0.0, %v359
        %v361 = vpop.f32.mrf.mxu0
        %v362 = vadd.f32 0.0, %v361
        %363 = vmatmul.bf16.gmra.mxu0 %v329
        %v364 = vpop.f32.mrf.mxu0
        %v365 = vadd.f32 0.0, %v364
        %v366 = vpop.f32.mrf.mxu0
        %v367 = vadd.f32 0.0, %v366
        %368 = vdwg.mxu0
        %369 = vxpose.xlu0.b32.start [1/16] %v341, 128
        %370 = vxpose.xlu0.b32.cont [2/16] %v343, 128
        %371 = vxpose.xlu0.b32.cont [3/16] 0.0, 128
        %372 = vxpose.xlu0.b32.cont [4/16] 0.0, 128
        %373 = vxpose.xlu0.b32.cont [5/16] 0.0, 128
        %374 = vxpose.xlu0.b32.cont [6/16] 0.0, 128
        %375 = vxpose.xlu0.b32.cont [7/16] 0.0, 128
        %376 = vxpose.xlu0.b32.cont [8/16] 0.0, 128
        %377 = vxpose.xlu0.b32.cont [9/16] 0.0, 128
        %378 = vxpose.xlu0.b32.cont [10/16] 0.0, 128
        %379 = vxpose.xlu0.b32.cont [11/16] 0.0, 128
        %380 = vxpose.xlu0.b32.cont [12/16] 0.0, 128
        %381 = vxpose.xlu0.b32.cont [13/16] 0.0, 128
        %382 = vxpose.xlu0.b32.cont [14/16] 0.0, 128
        %383 = vxpose.xlu0.b32.cont [15/16] 0.0, 128
        %384 = vxpose.xlu0.b32.end [16/16] 0.0, 128
        %v385 = vpop.trf.xlu0
        %v386 = vpop.trf.xlu0
        %v387 = vpop.trf.xlu0
        %v388 = vpop.trf.xlu0
        %v389 = vpop.trf.xlu0
        %v390 = vpop.trf.xlu0
        %v391 = vpop.trf.xlu0
        %v392 = vpop.trf.xlu0
        %v393 = vpop.trf.xlu0
        %v394 = vpop.trf.xlu0
        %v395 = vpop.trf.xlu0
        %v396 = vpop.trf.xlu0
        %v397 = vpop.trf.xlu0
        %v398 = vpop.trf.xlu0
        %v399 = vpop.trf.xlu0
        %v400 = vpop.trf.xlu0
        %401 = vxpose.xlu0.b32.start [1/16] %v360, 128
        %402 = vxpose.xlu0.b32.cont [2/16] %v362, 128
        %403 = vxpose.xlu0.b32.cont [3/16] 0.0, 128
        %404 = vxpose.xlu0.b32.cont [4/16] 0.0, 128
        %405 = vxpose.xlu0.b32.cont [5/16] 0.0, 128
        %406 = vxpose.xlu0.b32.cont [6/16] 0.0, 128
        %407 = vxpose.xlu0.b32.cont [7/16] 0.0, 128
        %408 = vxpose.xlu0.b32.cont [8/16] 0.0, 128
        %409 = vxpose.xlu0.b32.cont [9/16] 0.0, 128
        %410 = vxpose.xlu0.b32.cont [10/16] 0.0, 128
        %411 = vxpose.xlu0.b32.cont [11/16] 0.0, 128
        %412 = vxpose.xlu0.b32.cont [12/16] 0.0, 128
        %413 = vxpose.xlu0.b32.cont [13/16] 0.0, 128
        %414 = vxpose.xlu0.b32.cont [14/16] 0.0, 128
        %415 = vxpose.xlu0.b32.cont [15/16] 0.0, 128
        %416 = vxpose.xlu0.b32.end [16/16] 0.0, 128
        %v417 = vpop.trf.xlu0
        %v418 = vpop.trf.xlu0
        %v419 = vpop.trf.xlu0
        %v420 = vpop.trf.xlu0
        %v421 = vpop.trf.xlu0
        %v422 = vpop.trf.xlu0
        %v423 = vpop.trf.xlu0
        %v424 = vpop.trf.xlu0
        %v425 = vpop.trf.xlu0
        %v426 = vpop.trf.xlu0
        %v427 = vpop.trf.xlu0
        %v428 = vpop.trf.xlu0
        %v429 = vpop.trf.xlu0
        %v430 = vpop.trf.xlu0
        %v431 = vpop.trf.xlu0
        %v432 = vpop.trf.xlu0
        %v433 = vpack.c.bf16 %v385, %v385
        %v434 = vpack.c.bf16 %v386, %v386
        %v435 = vpack.c.bf16 %v387, %v387
        %v436 = vpack.c.bf16 %v388, %v388
        %v437 = vpack.c.bf16 %v389, %v389
        %v438 = vpack.c.bf16 %v390, %v390
        %v439 = vpack.c.bf16 %v391, %v391
        %v440 = vpack.c.bf16 %v392, %v392
        %v441 = vpack.c.bf16 %v393, %v393
        %v442 = vpack.c.bf16 %v394, %v394
        %v443 = vpack.c.bf16 %v395, %v395
        %v444 = vpack.c.bf16 %v396, %v396
        %v445 = vpack.c.bf16 %v397, %v397
        %v446 = vpack.c.bf16 %v398, %v398
        %v447 = vpack.c.bf16 %v399, %v399
        %v448 = vpack.c.bf16 %v400, %v400
        %v449 = vpack.c.bf16 %v417, %v417
        %v450 = vpack.c.bf16 %v418, %v418
        %v451 = vpack.c.bf16 %v419, %v419
        %v452 = vpack.c.bf16 %v420, %v420
        %v453 = vpack.c.bf16 %v421, %v421
        %v454 = vpack.c.bf16 %v422, %v422
        %v455 = vpack.c.bf16 %v423, %v423
        %v456 = vpack.c.bf16 %v424, %v424
        %v457 = vpack.c.bf16 %v425, %v425
        %v458 = vpack.c.bf16 %v426, %v426
        %v459 = vpack.c.bf16 %v427, %v427
        %v460 = vpack.c.bf16 %v428, %v428
        %v461 = vpack.c.bf16 %v429, %v429
        %v462 = vpack.c.bf16 %v430, %v430
        %v463 = vpack.c.bf16 %v431, %v431
        %v464 = vpack.c.bf16 %v432, %v432
        %vm465 = vcmask 125952
        %466 = vst.msk [vmem:[%s268] sm:$0xf] %vm465, %v433
        %467 = vst.msk [vmem:[%s268 + $0x4] sm:$0xf] %vm465, %v434
        %468 = vst.msk [vmem:[%s268 + $0x8] sm:$0xf] %vm465, %v435
        %469 = vst.msk [vmem:[%s268 + $0xc] sm:$0xf] %vm465, %v436
        %470 = vst.msk [vmem:[%s268 + $0x10] sm:$0xf] %vm465, %v437
        %471 = vst.msk [vmem:[%s268 + $0x14] sm:$0xf] %vm465, %v438
        %472 = vst.msk [vmem:[%s268 + $0x18] sm:$0xf] %vm465, %v439
        %473 = vst.msk [vmem:[%s268 + $0x1c] sm:$0xf] %vm465, %v440
        %474 = vst.msk [vmem:[%s268 + $0x20] sm:$0xf] %vm465, %v441
        %475 = vst.msk [vmem:[%s268 + $0x24] sm:$0xf] %vm465, %v442
        %476 = vst.msk [vmem:[%s268 + $0x28] sm:$0xf] %vm465, %v443
        %477 = vst.msk [vmem:[%s268 + $0x2c] sm:$0xf] %vm465, %v444
        %478 = vst.msk [vmem:[%s268 + $0x30] sm:$0xf] %vm465, %v445
        %479 = vst.msk [vmem:[%s268 + $0x34] sm:$0xf] %vm465, %v446
        %480 = vst.msk [vmem:[%s268 + $0x38] sm:$0xf] %vm465, %v447
        %481 = vst.msk [vmem:[%s268 + $0x3c] sm:$0xf] %vm465, %v448
        %482 = vst.msk [vmem:[%s268 + $0x40] sm:$0xf] %vm465, %v449
        %483 = vst.msk [vmem:[%s268 + $0x44] sm:$0xf] %vm465, %v450
        %484 = vst.msk [vmem:[%s268 + $0x48] sm:$0xf] %vm465, %v451
        %485 = vst.msk [vmem:[%s268 + $0x4c] sm:$0xf] %vm465, %v452
        %486 = vst.msk [vmem:[%s268 + $0x50] sm:$0xf] %vm465, %v453
        %487 = vst.msk [vmem:[%s268 + $0x54] sm:$0xf] %vm465, %v454
        %488 = vst.msk [vmem:[%s268 + $0x58] sm:$0xf] %vm465, %v455
        %489 = vst.msk [vmem:[%s268 + $0x5c] sm:$0xf] %vm465, %v456
        %490 = vst.msk [vmem:[%s268 + $0x60] sm:$0xf] %vm465, %v457
        %491 = vst.msk [vmem:[%s268 + $0x64] sm:$0xf] %vm465, %v458
        %492 = vst.msk [vmem:[%s268 + $0x68] sm:$0xf] %vm465, %v459
        %493 = vst.msk [vmem:[%s268 + $0x6c] sm:$0xf] %vm465, %v460
        %494 = vst.msk [vmem:[%s268 + $0x70] sm:$0xf] %vm465, %v461
        %495 = vst.msk [vmem:[%s268 + $0x74] sm:$0xf] %vm465, %v462
        %496 = vst.msk [vmem:[%s268 + $0x78] sm:$0xf] %vm465, %v463
        %497 = vst.msk [vmem:[%s268 + $0x7c] sm:$0xf] %vm465, %v464
        %v498 = vpack.c.bf16 %v365, %v346
        %v499 = vpack.c.bf16 %v367, %v348
        %500 = vst [vmem:[%s244] sm:$0xff] %v498
        %501 = vst [vmem:[%s244 + $0x8] sm:$0xff] %v499
        %s502 = smul.u32 32, %s24
        %p503 = scmp.lt.s32.totalorder %s23, 1
        %s504 = scalar_select %p503, %s23, 1
        %p505 = scmp.lt.s32.totalorder %s502, 31
        %s506 = scalar_select %p505, %s502, 31
        %s507 = smul.addr %s504, 32
        %s508 = sadd.s32 %s506, %s507
        %s509 = smul.addr %s508, 4
        %s510 = scalar_lea.vmem %s3, %s509
        %s511 = sand.u32 %s144, 1
        %s512 = scalar_lea.sflag [#allocation3], %s511
        %s513 = sand.u32 %s144, 1
        %s514 = smul.addr %s513, 16
        %s515 = scalar_lea.vmem [#allocation2], %s514
        // Predicated region
        $region33: #{tpu_custom_call.1} parent=31 // pred_check
          %p516 = pneg %p126
        $region34: #{tpu_custom_call.1} parent=31 // pred_check_branch
          %518 = sbr.rel (%p516) target = $region36
        $region35: #{tpu_custom_call.1} parent=31 // pred_region
          %s519 = smul.u32 32, %s24
        $region36: #{tpu_custom_call.1} parent=31 // pred_fallthru
          _
        // Predicated region
        $region37: #{tpu_custom_call.1} parent=31 // pred_check
          %p520 = pneg %p154
        $region38: #{tpu_custom_call.1} parent=31 // pred_check_branch
          %522 = sbr.rel (%p520) target = $region40
        $region39: #{tpu_custom_call.1} parent=31 // pred_region
          %s523 = smul.u32 2, %s24
          %525 = vsyncadd %s512, 0
          %s526 = smul.addr %s23, 4
          %s527 = sadd.s32 %s523, %s526
          %s528 = smul.addr %s527, 4
          %s529 = scalar_lea.hbm %s4, %s528
          %s530 = sshll.u32 %s515, 4
          %s531 = int_to_ptr.vmem [resolvable:$true] %s530
          %s532 = sshll.u32 %s529, 4
          %s533 = int_to_ptr.hbm [resolvable:$true] %s532
          %538 = dma.vmem_to_hbm [thread:$0]  %s531, 256, %s533, %s512, 128, 128, 8
        $region40: #{tpu_custom_call.1} parent=31 // pred_fallthru
          _
      $region32: #{tpu_custom_call.1} parent=5 // pred_fallthru
        _
      %p539 = scmp.le.s32.totalorder 2, %s14
      // Predicated region
      $region41: #{tpu_custom_call.1} parent=5 // pred_check
        %p540 = pneg %p539
      $region42: #{tpu_custom_call.1} parent=5 // pred_check_branch
        %542 = sbr.rel (%p540) target = $region44
      $region43: #{tpu_custom_call.1} parent=5 // pred_region
        %s543 = ssub.s32 %s14, 2
        // Predicated region
        $region45: #{tpu_custom_call.1} parent=43 // pred_check
          %p544 = pneg %p132
        $region46: #{tpu_custom_call.1} parent=43 // pred_check_branch
          %546 = sbr.rel (%p544) target = $region48
        $region47: #{tpu_custom_call.1} parent=43 // pred_region
          %s547 = smul.u32 32, %s26
          %p548 = scmp.lt.s32.totalorder %s25, 1
          %s549 = scalar_select %p548, %s25, 1
          %p550 = scmp.lt.s32.totalorder %s547, 31
          %s551 = scalar_select %p550, %s547, 31
          %s552 = smul.addr %s549, 32
          %s553 = sadd.s32 %s551, %s552
          %s554 = smul.addr %s553, 4
          %s555 = scalar_lea.vmem %s3, %s554
        $region48: #{tpu_custom_call.1} parent=43 // pred_fallthru
          _
        // Predicated region
        $region49: #{tpu_custom_call.1} parent=43 // pred_check
          %p556 = pneg %p160
        $region50: #{tpu_custom_call.1} parent=43 // pred_check_branch
          %558 = sbr.rel (%p556) target = $region52
        $region51: #{tpu_custom_call.1} parent=43 // pred_region
          %s559 = sand.u32 %s145, 1
          %s560 = scalar_lea.sflag [#allocation3], %s559
          %s561 = sand.u32 %s145, 1
          %s562 = smul.addr %s561, 16
          %s563 = scalar_lea.vmem [#allocation2], %s562
          %565 = dma.done %s560, 256
        $region52: #{tpu_custom_call.1} parent=43 // pred_fallthru
          _
      $region44: #{tpu_custom_call.1} parent=5 // pred_fallthru
        _
    $region6: #{tpu_custom_call.1} parent=1 // loop_footer
      %s18 = sadd.s32 1, %s14
    $region7: #{tpu_custom_call.1} parent=1 // loop_footer_branch
      %13 = sbr.rel target = $region3
    $region8: #{tpu_custom_call.1} parent=1 // loop_exit
      _
    %566 = vsyncpa [#allocation3], 1
    %s567 = scalar_lea.sflag [#allocation3], 1
    %568 = vsyncpa %s567, 1

</llo_original>
